<compile_context>
chip_gen: v6e
topology: v6e:2x2x1
jax: 0.10.0
libtpu: 0.0.40
codegen_flags: <defaults>
</compile_context>

<pallas_src>
import functools

import jax
import jax.numpy as jnp
from jax.experimental import pallas as pl
from jax.experimental.pallas import tpu as pltpu


def _cwkl_kernel(pt_ref, ps_ref, w_ref, out_ref, *, batch, tb):
    pt = pt_ref[...].astype(jnp.float32)
    ps = ps_ref[...].astype(jnp.float32)
    w = w_ref[...].astype(jnp.float32)

    # Numerically stable softmax along the class (lane) axis; per-row exact
    # reciprocal + broadcast multiply instead of a per-element divide.
    pt_exp = jnp.exp(pt - jnp.max(pt, axis=-1, keepdims=True))
    pt_sm = pt_exp * pl.reciprocal(jnp.sum(pt_exp, axis=-1, keepdims=True))

    ps_exp = jnp.exp(ps - jnp.max(ps, axis=-1, keepdims=True))
    ps_sm = ps_exp * pl.reciprocal(jnp.sum(ps_exp, axis=-1, keepdims=True))

    # Fused single log (2 exp + 1 log per element instead of 2 exp + 2 log);
    # eps clamp kept for parity with torch.log(softmax + 1e-10).
    log_ratio = jnp.log((pt_sm + 1e-10) / (ps_sm + 1e-10))
    cwkl = w * pt_sm * log_ratio

    # Tail-block masking: rows past the true batch contribute exactly zero
    # (replaces wrapper-side batch padding).  Safe: max/exp/log are per-row,
    # so garbage tail rows never leak into valid rows, and where() drops them.
    rows = (jax.lax.broadcasted_iota(jnp.int32, cwkl.shape, 0)
            + pl.program_id(0) * tb)
    cwkl = jnp.where(rows < batch, cwkl, 0.0)

    # Per-block partial sum broadcast into a lane-dense (1, 8, 128) tile.
    out_ref[...] = jnp.full(out_ref.shape, jnp.sum(cwkl), dtype=jnp.float32)


def _round_up(x, m):
    return ((x + m - 1) // m) * m


def _vmem_budget_bytes():
    """(pipeline-buffer budget, vmem_limit_bytes), sized per TPU generation."""
    try:
        cap = pltpu.get_tpu_info().vmem_capacity_bytes
    except Exception:  # no TPU info available -> conservative (v7x-safe)
        cap = 64 * 1024 * 1024
    if cap <= 64 * 1024 * 1024:                   # v7x: 64 MiB VMEM per TC
        return 24 * 1024 * 1024, 48 * 1024 * 1024
    return 48 * 1024 * 1024, 64 * 1024 * 1024     # v5e / v6e: 128 MiB VMEM


@functools.partial(jax.jit, static_argnames=("max_rows",))
def cwkl_loss(pt, ps, weights, *, max_rows=8192):
    """CWKL loss. pt, ps, weights: (batch, num_classes). Returns scalar f32."""
    assert pt.shape == ps.shape == weights.shape and pt.ndim == 2
    batch, n_cls = pt.shape

    # VMEM layout pads the lane (class) axis to 128; budget accordingly, but
    # HBM traffic and the block's last dim stay at the true n_cls.
    c_lanes = _round_up(n_cls, 128)
    budget, vmem_limit = _vmem_budget_bytes()
    bytes_per_row = 2 * c_lanes * sum(          # 2 = double-buffered pipeline
        jnp.dtype(a.dtype).itemsize for a in (pt, ps, weights))
    tb_vmem = max(8, (budget // bytes_per_row) // 8 * 8)
    tb = int(min(max_rows, tb_vmem, _round_up(batch, 8)))
    n_blocks = pl.cdiv(batch, tb)

    # Last dim = full extent (Mosaic lane-masks C < 128); tail rows masked
    # in-kernel, so no jnp.pad / extra HBM pass is ever issued.
    in_spec = pl.BlockSpec((tb, n_cls), lambda i: (i, 0))
    in_bytes = sum(a.size * jnp.dtype(a.dtype).itemsize
                   for a in (pt, ps, weights))

    partials = pl.pallas_call(
        functools.partial(_cwkl_kernel, batch=batch, tb=tb),
        out_shape=jax.ShapeDtypeStruct((n_blocks, 8, 128), jnp.float32),
        grid_spec=pltpu.PrefetchScalarGridSpec(
            num_scalar_prefetch=0,
            grid=(n_blocks,),
            in_specs=[in_spec, in_spec, in_spec],
            out_specs=pl.BlockSpec((1, 8, 128), lambda i: (i, 0, 0)),
        ),
        compiler_params=pltpu.CompilerParams(
            dimension_semantics=("parallel",),
            vmem_limit_bytes=vmem_limit,
        ),
        cost_estimate=pl.CostEstimate(
            flops=10 * batch * n_cls,
            transcendentals=3 * batch * n_cls,
            bytes_accessed=in_bytes + n_blocks * 8 * 128 * 4,
        ),
    )(pt, ps, weights)

    # sum over classes then mean over batch == total sum / batch.
    return jnp.sum(partials[:, 0, 0]) / jnp.float32(batch)


def _cwkl_ref(pt, ps, weights):
    pt_sm = jax.nn.softmax(pt, axis=1)
    ps_sm = jax.nn.softmax(ps, axis=1)
    cwkl = weights * pt_sm * (jnp.log(pt_sm + 1e-10) - jnp.log(ps_sm + 1e-10))
    return jnp.mean(jnp.sum(cwkl, axis=1))


if __name__ == "__main__":
    batch, num_classes = 8, 32
    key = jax.random.PRNGKey(0)
    k_pt, k_ps, k_w = jax.random.split(key, 3)
    PT = jax.random.normal(k_pt, (batch, num_classes), dtype=jnp.float32)
    PS = jax.random.normal(k_ps, (batch, num_classes), dtype=jnp.float32)
    weights = jax.random.uniform(k_w, (batch, num_classes), dtype=jnp.float32)

    loss = jax.block_until_ready(cwkl_loss(PT, PS, weights))
    ref = jax.block_until_ready(_cwkl_ref(PT, PS, weights))

    assert jnp.allclose(loss, ref, rtol=1e-5, atol=1e-5), (loss, ref)
    print("KERNEL_OK")
</pallas_src>

<mosaic_0001>
module attributes {stable_mosaic.version = 11 : i64} {
  func.func @_cwkl_kernel(%arg0: i32, %arg1: memref<8x32xf32, #tpu.memory_space<vmem>>, %arg2: memref<8x32xf32, #tpu.memory_space<vmem>>, %arg3: memref<8x32xf32, #tpu.memory_space<vmem>>, %arg4: memref<1x8x128xf32, #tpu.memory_space<vmem>>) attributes {dimension_semantics = [#tpu.dimension_semantics<parallel>], iteration_bounds = array<i64: 1>, scalar_prefetch = 0 : i64, scratch_operands = 0 : i64, tpu.core_type = #tpu.core_type<tc>, window_params = [{transform_indices = @transform_0, window_bounds = array<i64: 8, 32>}, {transform_indices = @transform_1, window_bounds = array<i64: 8, 32>}, {transform_indices = @transform_2, window_bounds = array<i64: 8, 32>}, {transform_indices = @transform_3, window_bounds = array<i64: 1, 8, 128>}]} {
    %c0 = arith.constant 0 : index
    %c0_0 = arith.constant 0 : index
    %0 = vector.load %arg1[%c0, %c0_0] : memref<8x32xf32, #tpu.memory_space<vmem>>, vector<8x32xf32>
    %c0_1 = arith.constant 0 : index
    %c0_2 = arith.constant 0 : index
    %1 = vector.load %arg2[%c0_1, %c0_2] : memref<8x32xf32, #tpu.memory_space<vmem>>, vector<8x32xf32>
    %c0_3 = arith.constant 0 : index
    %c0_4 = arith.constant 0 : index
    %2 = vector.load %arg3[%c0_3, %c0_4] : memref<8x32xf32, #tpu.memory_space<vmem>>, vector<8x32xf32>
    %cst = arith.constant dense<0xFF800000> : vector<8xf32>
    %3 = vector.multi_reduction <maximumf>, %0, %cst [1] : vector<8x32xf32> to vector<8xf32>
    %4 = vector.shape_cast %3 : vector<8xf32> to vector<8x1xf32>
    %5 = vector.broadcast %4 : vector<8x1xf32> to vector<8x32xf32>
    %6 = arith.subf %0, %5 : vector<8x32xf32>
    %7 = math.exp %6 : vector<8x32xf32>
    %cst_5 = arith.constant dense<0.000000e+00> : vector<8xf32>
    %8 = vector.multi_reduction <add>, %7, %cst_5 [1] : vector<8x32xf32> to vector<8xf32>
    %9 = vector.shape_cast %8 : vector<8xf32> to vector<8x1xf32>
    %10 = tpu.reciprocal %9 : vector<8x1xf32> -> vector<8x1xf32>
    %11 = vector.broadcast %10 : vector<8x1xf32> to vector<8x32xf32>
    %12 = arith.mulf %7, %11 : vector<8x32xf32>
    %cst_6 = arith.constant dense<0xFF800000> : vector<8xf32>
    %13 = vector.multi_reduction <maximumf>, %1, %cst_6 [1] : vector<8x32xf32> to vector<8xf32>
    %14 = vector.shape_cast %13 : vector<8xf32> to vector<8x1xf32>
    %15 = vector.broadcast %14 : vector<8x1xf32> to vector<8x32xf32>
    %16 = arith.subf %1, %15 : vector<8x32xf32>
    %17 = math.exp %16 : vector<8x32xf32>
    %cst_7 = arith.constant dense<0.000000e+00> : vector<8xf32>
    %18 = vector.multi_reduction <add>, %17, %cst_7 [1] : vector<8x32xf32> to vector<8xf32>
    %19 = vector.shape_cast %18 : vector<8xf32> to vector<8x1xf32>
    %20 = tpu.reciprocal %19 : vector<8x1xf32> -> vector<8x1xf32>
    %21 = vector.broadcast %20 : vector<8x1xf32> to vector<8x32xf32>
    %22 = arith.mulf %17, %21 : vector<8x32xf32>
    %cst_8 = arith.constant 1.000000e-10 : f32
    %23 = vector.broadcast %cst_8 : f32 to vector<8x32xf32>
    %24 = arith.addf %12, %23 : vector<8x32xf32>
    %cst_9 = arith.constant 1.000000e-10 : f32
    %25 = vector.broadcast %cst_9 : f32 to vector<8x32xf32>
    %26 = arith.addf %22, %25 : vector<8x32xf32>
    %27 = arith.divf %24, %26 : vector<8x32xf32>
    %28 = math.log %27 : vector<8x32xf32>
    %29 = arith.mulf %2, %12 : vector<8x32xf32>
    %30 = arith.mulf %29, %28 : vector<8x32xf32>
    %31 = tpu.iota {dimensions = array<i32: 0>} : vector<8x32xi32>
    %c8_i32 = arith.constant 8 : i32
    %32 = arith.muli %arg0, %c8_i32 : i32
    %33 = vector.broadcast %32 : i32 to vector<8x32xi32>
    %34 = arith.addi %31, %33 : vector<8x32xi32>
    %c8_i32_10 = arith.constant 8 : i32
    %35 = vector.broadcast %c8_i32_10 : i32 to vector<8x32xi32>
    %36 = arith.cmpi slt, %34, %35 : vector<8x32xi32>
    %cst_11 = arith.constant 0.000000e+00 : f32
    %37 = vector.broadcast %cst_11 : f32 to vector<8x32xf32>
    %38 = arith.select %36, %30, %37 : vector<8x32xi1>, vector<8x32xf32>
    %39 = vector.shape_cast %38 : vector<8x32xf32> to vector<1x8x32xf32>
    %cst_12 = arith.constant dense<0.000000e+00> : vector<1xf32>
    %40 = vector.multi_reduction <add>, %39, %cst_12 [1, 2] : vector<1x8x32xf32> to vector<1xf32>
    %41 = vector.shape_cast %40 : vector<1xf32> to vector<1x1x1xf32>
    %42 = vector.extract %41[0, 0, 0] : f32 from vector<1x1x1xf32>
    %43 = vector.broadcast %42 : f32 to vector<1x8x128xf32>
    %c0_13 = arith.constant 0 : index
    %c0_14 = arith.constant 0 : index
    %c0_15 = arith.constant 0 : index
    %44 = vector.load %arg4[%c0_13, %c0_14, %c0_15] : memref<1x8x128xf32, #tpu.memory_space<vmem>>, vector<1x8x128xf32>
    tpu.vector_store %arg4[%c0_13, %c0_14, %c0_15], %43 {strides = array<i32>} : memref<1x8x128xf32, #tpu.memory_space<vmem>>, vector<1x8x128xf32>,
    return
  }
  func.func @transform_0(%arg0: i32) -> (i32, i32) {
    %c0_i32 = arith.constant 0 : i32
    %c0_i32_0 = arith.constant 0 : i32
    return %arg0, %c0_i32 : i32, i32
  }
  func.func @transform_1(%arg0: i32) -> (i32, i32) {
    %c0_i32 = arith.constant 0 : i32
    %c0_i32_0 = arith.constant 0 : i32
    return %arg0, %c0_i32 : i32, i32
  }
  func.func @transform_2(%arg0: i32) -> (i32, i32) {
    %c0_i32 = arith.constant 0 : i32
    %c0_i32_0 = arith.constant 0 : i32
    return %arg0, %c0_i32 : i32, i32
  }
  func.func @transform_3(%arg0: i32) -> (i32, i32, i32) {
    %c0_i32 = arith.constant 0 : i32
    %c0_i32_0 = arith.constant 0 : i32
    %c0_i32_1 = arith.constant 0 : i32
    return %arg0, %c0_i32, %c0_i32_0 : i32, i32, i32
  }
}

</mosaic_0001>

<llo_original>
// kernel: cwkl_loss.1
$region0: #{cwkl_loss.1}
  #allocation0 [shape = 'u32[]', space=smem, size = 0x4, offset = 0x4, fixed_abs, tag = 'smem constant byte address 0x4 - core index']
  #allocation1 [shape = 'u32[144,128]{1,0:T(1,128)}', space=vmem, size = 0x12000, scoped, tag = 'internal scratch']
  %s0 = inlined_call_operand.hbm [shape: f32[8,32], index: 0, kind: input, shape index: {}]
  %s1 = inlined_call_operand.hbm [shape: f32[8,32], index: 1, kind: input, shape index: {}]
  %s2 = inlined_call_operand.hbm [shape: f32[8,32], index: 2, kind: input, shape index: {}]
  %s3 = inlined_call_operand.vmem [shape: f32[1,8,128], index: 3, kind: output, shape index: {}]
  %s4 = sld [smem:[#allocation0]]
  $region34: #{cwkl_loss.1} parent=0
    _
  %s6 = ssub.s32 1, %s4
  %s7 = scalar_select 0, %s6, %s4
  $region1: #{cwkl_loss.1} parent=0
    #allocation2 [shape = 'u8[4096]{0}', space=vmem, size = 0x1000, scoped, tag = 'input window, operand 0, single buffered']
    #allocation3 [shape = 's32[1]{0}', space=sflag, size = 0x4, scoped, tag = 'scoped memory for cwkl_loss.1']
    #allocation4 [shape = 'u8[4096]{0}', space=vmem, size = 0x1000, scoped, tag = 'input window, operand 1, single buffered']
    #allocation5 [shape = 's32[1]{0}', space=sflag, size = 0x4, scoped, tag = 'scoped memory for cwkl_loss.1']
    #allocation6 [shape = 'u8[4096]{0}', space=vmem, size = 0x1000, scoped, tag = 'input window, operand 2, single buffered']
    %8 = vsyncpa [#allocation3], 0
    %9 = vsyncpa [#allocation5], 0
    // Predicated region
    $region2: #{cwkl_loss.1} parent=1 // pred_check
      _
    $region3: #{cwkl_loss.1} parent=1 // pred_check_branch
      %11 = sbr.rel (0) target = $region5
    $region4: #{cwkl_loss.1} parent=1 // pred_region
      %s13 = ssub.s32 128, 128
      %14 = vsyncadd [#allocation3], %s13
      %s16 = sshll.u32 [#allocation2], 4
      %s17 = int_to_ptr.vmem [resolvable:$true] %s16
      %19 = dma.hbm_to_vmem [thread:$0]  %s0, 128, %s17, [#allocation3]
    $region5: #{cwkl_loss.1} parent=1 // pred_fallthru
      _
    // Predicated region
    $region6: #{cwkl_loss.1} parent=1 // pred_check
      _
    $region7: #{cwkl_loss.1} parent=1 // pred_check_branch
      %21 = sbr.rel (0) target = $region9
    $region8: #{cwkl_loss.1} parent=1 // pred_region
      %s23 = ssub.s32 128, 128
      %24 = vsyncadd [#allocation5], %s23
      %s26 = sshll.u32 [#allocation4], 4
      %s27 = int_to_ptr.vmem [resolvable:$true] %s26
      %29 = dma.hbm_to_vmem [thread:$0]  %s1, 128, %s27, [#allocation5]
    $region9: #{cwkl_loss.1} parent=1 // pred_fallthru
      _
    // Predicated region
    $region10: #{cwkl_loss.1} parent=1 // pred_check
      _
    $region11: #{cwkl_loss.1} parent=1 // pred_check_branch
      %31 = sbr.rel (0) target = $region13
    $region12: #{cwkl_loss.1} parent=1 // pred_region
      %s33 = ssub.s32 128, 128
      %34 = vsyncadd [#allocation5], %s33
      %s36 = sshll.u32 [#allocation6], 4
      %s37 = int_to_ptr.vmem [resolvable:$true] %s36
      %39 = dma.hbm_to_vmem [thread:$0]  %s2, 128, %s37, [#allocation5]
    $region13: #{cwkl_loss.1} parent=1 // pred_fallthru
      _
    // Predicated region
    $region14: #{cwkl_loss.1} parent=1 // pred_check
      _
    $region15: #{cwkl_loss.1} parent=1 // pred_check_branch
      %41 = sbr.rel (0) target = $region17
    $region16: #{cwkl_loss.1} parent=1 // pred_region
      %42 = dma.done [#allocation3], 128
    $region17: #{cwkl_loss.1} parent=1 // pred_fallthru
      _
    // Predicated region
    $region18: #{cwkl_loss.1} parent=1 // pred_check
      _
    $region19: #{cwkl_loss.1} parent=1 // pred_check_branch
      %44 = sbr.rel (0) target = $region21
    $region20: #{cwkl_loss.1} parent=1 // pred_region
      %45 = dma.done [#allocation5], 128
    $region21: #{cwkl_loss.1} parent=1 // pred_fallthru
      _
    // Predicated region
    $region22: #{cwkl_loss.1} parent=1 // pred_check
      _
    $region23: #{cwkl_loss.1} parent=1 // pred_check_branch
      %47 = sbr.rel (0) target = $region25
    $region24: #{cwkl_loss.1} parent=1 // pred_region
      %48 = dma.done [#allocation5], 128
    $region25: #{cwkl_loss.1} parent=1 // pred_fallthru
      _
    %v49 = vld [vmem:[#allocation2] sm:$0xff]
    %v50 = vld [vmem:[#allocation4] sm:$0xff]
    %v51 = vld [vmem:[#allocation6] sm:$0xff]
    %vm52 = vcmask 261120
    %v53 = vsel %vm52, %v49, -inf
    %54 = vmax.xlane.f32.xlu0 %v53
    %v55 = vpop.xlane.xlu0 %54
    %v56 = vsub.f32 %v49, %v55
    %v57 = vmul.f32 %v56, 1.442695
    %v58 = vpow.pop %v57
    %v59 = vsel %vm52, %v58, 0.0
    %60 = vadd.xlane.f32.xlu0 %v59
    %v61 = vpop.xlane.xlu0 %60
    %v62 = vrcp.pop %v61
    %v63 = vmul.f32 %v58, %v62
    %v64 = vsel %vm52, %v50, -inf
    %65 = vmax.xlane.f32.xlu0 %v64
    %v66 = vpop.xlane.xlu0 %65
    %v67 = vsub.f32 %v50, %v66
    %v68 = vmul.f32 %v67, 1.442695
    %v69 = vpow.pop %v68
    %v70 = vsel %vm52, %v69, 0.0
    %71 = vadd.xlane.f32.xlu0 %v70
    %v72 = vpop.xlane.xlu0 %71
    %v73 = vrcp.pop %v72
    %v74 = vmul.f32 %v69, %v73
    %v75 = vadd.f32 %v63, 1e-10
    %v76 = vadd.f32 %v74, 1e-10
    %v77 = vrcp.pop %v76
    %v78 = vmul.f32 %v75, %v77
    %v79 = vlog2.pop %v78
    %v80 = vmul.f32 %v79, 0.6931472
    %v81 = vmul.f32 %v51, %v63
    %v82 = vmul.f32 %v81, %v80
    %v83 = vlaneseq
    %v84 = vshrl.u32 %v83, 7
    %s85 = smul.u32 0, 8
    %v86 = vstv %s85
    %v87 = vadd.s32 %v84, %v86
    %vm88 = vcmp.lt.s32.totalorder %v87, 8
    %v89 = vsel %vm88, %v82, 0.0
    %v90 = vsel %vm52, %v89, 0.0
    %91 = vadd.xlane.f32.xlu0 %v90
    %v92 = vpop.xlane.xlu0 %91
    %v93 = vrot.slane %v92, 4
    %v94 = vadd.f32 %v92, %v93
    %v95 = vrot.slane %v94, 2
    %v96 = vadd.f32 %v94, %v95
    %v97 = vrot.slane %v96, 1
    %v98 = vadd.f32 %v96, %v97
    %s99 = vtos %v98
    %v100 = vstv %s99
    %101 = vst [vmem:[%s3] sm:$0xff] %v100
    // Predicated region
    $region26: #{cwkl_loss.1} parent=1 // pred_check
      _
    $region27: #{cwkl_loss.1} parent=1 // pred_check_branch
      %103 = sbr.rel (0) target = $region29
    $region28: #{cwkl_loss.1} parent=1 // pred_region
      _
    $region29: #{cwkl_loss.1} parent=1 // pred_fallthru
      _
    // Predicated region
    $region30: #{cwkl_loss.1} parent=1 // pred_check
      _
    $region31: #{cwkl_loss.1} parent=1 // pred_check_branch
      %105 = sbr.rel (0) target = $region33
    $region32: #{cwkl_loss.1} parent=1 // pred_region
      _
    $region33: #{cwkl_loss.1} parent=1 // pred_fallthru
      _
    %106 = vsyncpa [#allocation3], 1
    %107 = vsyncpa [#allocation5], 1

</llo_original>
